<compile_context>
chip_gen: v6e
topology: v6e:2x2x1
jax: 0.10.0
libtpu: 0.0.40
codegen_flags: <defaults>
</compile_context>

<pallas_src>
import numpy as np
import jax
import jax.numpy as jnp
from jax.experimental import pallas as pl
from jax.experimental.pallas import tpu as pltpu

LANE = 128
TARGET_ROWS = 256  # target M (= tile_h * out_w) per matmul step

_TAPS_2x2 = tuple((u, v) for u in range(2) for v in range(2))
_TAPS_3x3 = tuple((dy, dx) for dy in range(3) for dx in range(3))
_TAPS_5x5 = tuple((dy, dx) for dy in range(5) for dx in range(5))


def _ceil_to(x, m):
    return ((x + m - 1) // m) * m


def _vmem_limit_bytes():
    """~75% of physical VMEM, capped at 100 MiB (~96 MiB on v5e/v6e, ~48 MiB on v7x)."""
    try:
        cap = getattr(pltpu.get_tpu_info(), "vmem_capacity_bytes", None)
        if cap:
            return int(min(cap * 3 // 4, 100 * 1024 * 1024))
    except Exception:
        pass
    return 48 * 1024 * 1024


def _pick_tile_h(out_h, out_w, halo_h, target_rows=TARGET_ROWS):
    """Largest divisor of out_h with tile_h*out_w <= ~target_rows.  When tiling
    (tile_h < out_h) the tile height must be a multiple of the row halo so the extra
    halo rows land on an aligned block of the (spatially pre-padded) input."""
    cap = max(target_rows // max(out_w, 1), halo_h, 1)
    if out_h <= cap:
        return out_h                      # whole image resident (single row tile)
    best = None
    for th in range(1, out_h):
        if out_h % th == 0 and th <= cap and th % halo_h == 0:
            best = th
    return best if best is not None else out_h


# ----------------------------------------------------------------------------
# Generic conv kernel: per-kernel-row tap grouping, f32 accumulation, fused act.
# ----------------------------------------------------------------------------
def _make_conv_kernel(tap_rows, tap_cols, tile_h, out_w, cin, cout, act, split):
    kcin = tap_cols * cin
    m = tile_h * out_w
    halo = tap_rows - 1

    def _accumulate(read_tap, w_ref):
        acc = None
        for dy in range(tap_rows):                       # static taps, K = tap_cols*cin
            parts = [read_tap(dy, dx) for dx in range(tap_cols)]
            lhs = jnp.concatenate(parts, axis=-1).reshape(m, kcin)
            d = jnp.dot(lhs, w_ref[pl.ds(dy * kcin, kcin), :],
                        preferred_element_type=jnp.float32)
            acc = d if acc is None else acc + d
        return acc

    def _finish(acc, b_ref, o_ref):
        acc = acc + b_ref[...]
        if act == "relu":
            y = jnp.maximum(acc, 0.0)
        elif act == "img_att":
            # single tanh: ch 0..2 -> tanh(x) (img), ch 3 -> sigmoid(x)=0.5*tanh(x/2)+0.5
            ch = jax.lax.broadcasted_iota(jnp.int32, acc.shape, 1)
            is_img = ch < 3
            t = jnp.tanh(jnp.where(is_img, acc, 0.5 * acc))
            y = jnp.where(is_img, t, 0.5 * t + 0.5)
        else:
            y = acc
        o_ref[0] = y.reshape(tile_h, out_w, cout).astype(o_ref.dtype)

    if split:
        # Row-halo tiling: main tile rows + (k-1) halo rows arrive as two blocks and are
        # stitched into a small VMEM scratch (tile-sized footprint at any resolution).
        def kernel(xm_ref, xh_ref, w_ref, b_ref, o_ref, xt_ref):
            xt_ref[pl.ds(0, tile_h), :, :] = xm_ref[0]
            xt_ref[pl.ds(tile_h, halo), :, :] = xh_ref[0]
            acc = _accumulate(
                lambda dy, dx: xt_ref[pl.ds(dy, tile_h), pl.ds(dx, out_w), :], w_ref)
            _finish(acc, b_ref, o_ref)
        return kernel

    def kernel(x_ref, w_ref, b_ref, o_ref):
        acc = _accumulate(
            lambda dy, dx: x_ref[0, pl.ds(dy, tile_h), pl.ds(dx, out_w), :], w_ref)
        _finish(acc, b_ref, o_ref)
    return kernel


def _conv_im2col(x, w_flat, b_flat, tap_rows, tap_cols, out_h, out_w, act,
                 out_dtype, vmem_limit):
    """x: (N, Hx, Wx, Cin_pad) spatially pre-padded NHWC; w_flat: (taps*Cin_pad, Cout_pad)."""
    n, hx, wx, cin = x.shape
    k_total, cout = w_flat.shape
    assert k_total == tap_rows * tap_cols * cin
    halo = tap_rows - 1
    tile_h = _pick_tile_h(out_h, out_w, halo)
    split = tile_h < out_h
    t_steps = out_h // tile_h

    kernel = _make_conv_kernel(tap_rows, tap_cols, tile_h, out_w, cin, cout, act, split)
    b2d = b_flat.reshape(1, cout)

    # TODO(synk): weight/bias blocks are grid-constant; single-buffer them with
    # pipeline_mode=pl.Buffered(1) once that is universally supported.
    w_spec = pl.BlockSpec((k_total, cout), lambda b, t: (0, 0))
    b_spec = pl.BlockSpec((1, cout), lambda b, t: (0, 0))
    out_spec = pl.BlockSpec((1, tile_h, out_w, cout), lambda b, t: (b, t, 0, 0))

    if split:
        halo_step = tile_h // halo
        in_specs = [
            pl.BlockSpec((1, tile_h, wx, cin), lambda b, t: (b, t, 0, 0)),
            pl.BlockSpec((1, halo, wx, cin),
                         lambda b, t: (b, (t + 1) * halo_step, 0, 0)),
            w_spec, b_spec,
        ]
        args = (x, x, w_flat, b2d)
        scratch = [pltpu.VMEM((tile_h + halo, wx, cin), x.dtype)]
    else:
        in_specs = [pl.BlockSpec((1, hx, wx, cin), lambda b, t: (b, 0, 0, 0)),
                    w_spec, b_spec]
        args = (x, w_flat, b2d)
        scratch = []

    return pl.pallas_call(
        kernel,
        out_shape=jax.ShapeDtypeStruct((n, out_h, out_w, cout), out_dtype),
        grid=(n, t_steps),
        in_specs=in_specs,
        out_specs=out_spec,
        scratch_shapes=scratch,
        compiler_params=pltpu.CompilerParams(
            dimension_semantics=("parallel", "parallel"),
            vmem_limit_bytes=vmem_limit),
    )(*args)


# ----------------------------------------------------------------------------
# Fused residual blocks: all blocks in one pallas_call, feature map resident in VMEM.
# ----------------------------------------------------------------------------
def _make_resblocks_kernel(n_blocks, h, w, cpad):
    hw = h * w

    def _conv3x3(src_ref, w_ref, blk):
        acc = None
        for dy in range(3):
            parts = [src_ref[pl.ds(dy, h), pl.ds(dx, w), :] for dx in range(3)]
            lhs = jnp.concatenate(parts, axis=-1).reshape(hw, 3 * cpad)
            d = jnp.dot(lhs.astype(w_ref.dtype), w_ref[blk, dy],
                        preferred_element_type=jnp.float32)
            acc = d if acc is None else acc + d
        return acc

    def kernel(x_ref, w1_ref, b1_ref, w2_ref, b2_ref, o_ref, a_ref, m_ref):
        # a_ref/m_ref are zero-padded (h+2, w+2) f32 scratches: borders stay 0 (pad=1).
        a_ref[...] = jnp.zeros(a_ref.shape, a_ref.dtype)
        m_ref[...] = jnp.zeros(m_ref.shape, m_ref.dtype)
        a_ref[pl.ds(1, h), pl.ds(1, w), :] = x_ref[0].astype(a_ref.dtype)
        for blk in range(n_blocks):                      # static, weights stay resident
            hmid = jnp.maximum(_conv3x3(a_ref, w1_ref, blk) + b1_ref[blk], 0.0)
            m_ref[pl.ds(1, h), pl.ds(1, w), :] = hmid.reshape(h, w, cpad).astype(m_ref.dtype)
            resid = a_ref[pl.ds(1, h), pl.ds(1, w), :].reshape(hw, cpad)
            y = _conv3x3(m_ref, w2_ref, blk) + b2_ref[blk] + resid
            a_ref[pl.ds(1, h), pl.ds(1, w), :] = y.reshape(h, w, cpad).astype(a_ref.dtype)
        o_ref[0] = a_ref[pl.ds(1, h), pl.ds(1, w), :].astype(o_ref.dtype)

    return kernel


def _res_blocks_fused(x, w1, b1, w2, b2, vmem_limit):
    n, h, w, cpad = x.shape
    n_blocks = w1.shape[0]
    kernel = _make_resblocks_kernel(n_blocks, h, w, cpad)
    return pl.pallas_call(
        kernel,
        out_shape=jax.ShapeDtypeStruct((n, h, w, cpad), x.dtype),
        grid=(n,),
        in_specs=[
            pl.BlockSpec((1, h, w, cpad), lambda b: (b, 0, 0, 0)),
            pl.BlockSpec(w1.shape, lambda b: (0, 0, 0, 0)),
            pl.BlockSpec(b1.shape, lambda b: (0, 0, 0)),
            pl.BlockSpec(w2.shape, lambda b: (0, 0, 0, 0)),
            pl.BlockSpec(b2.shape, lambda b: (0, 0, 0)),
        ],
        out_specs=pl.BlockSpec((1, h, w, cpad), lambda b: (b, 0, 0, 0)),
        scratch_shapes=[pltpu.VMEM((h + 2, w + 2, cpad), jnp.float32),
                        pltpu.VMEM((h + 2, w + 2, cpad), jnp.float32)],
        compiler_params=pltpu.CompilerParams(
            dimension_semantics=("parallel",),
            vmem_limit_bytes=vmem_limit),
    )(x, w1, b1, w2, b2)


# ----------------------------------------------------------------------------
# Layout plumbing (plain JAX, one fused op per layer).
# TODO(synk): fold the decoder depth_to_space + pad into the next layer's weight packing
# to remove the remaining inter-layer XLA HBM roundtrips.
# ----------------------------------------------------------------------------
def _space_to_depth_pad(x, out_h, out_w):
    """Zero-pad (as PyTorch padding=1) to (2*(out_h+1), 2*(out_w+1)) and pixel-unshuffle."""
    n, h, w, c = x.shape
    hp, wp = out_h + 1, out_w + 1
    xp = jnp.pad(x, ((0, 0), (1, 2 * hp - h - 1), (1, 2 * wp - w - 1), (0, 0)))
    z = xp.reshape(n, hp, 2, wp, 2, c).transpose(0, 1, 3, 2, 4, 5)
    return z.reshape(n, hp, wp, 4 * c)   # z[..., (2a+b)*c + ci] = x_pad[2y+a, 2x+b, ci]


def _depth_to_space(y, cp):
    """(N, H, W, 4*cp) phase-grouped (g = 2r+c) -> (N, 2H, 2W, cp)."""
    n, h, w, _ = y.shape
    return (y.reshape(n, h, w, 2, 2, cp)
             .transpose(0, 1, 3, 2, 4, 5)
             .reshape(n, 2 * h, 2 * w, cp))


# ----------------------------------------------------------------------------
# Weight packing (numpy, done once at init).  Rows are dy-major so the kernel can slice
# one contiguous K = k_w*Cin_pad group per kernel row.
# ----------------------------------------------------------------------------
def _pack_conv_s2(w_oihw, bias, cin_pad, cout_pad, w_dtype):
    """Conv2d k=3 s=2 p=1 over the space-to-depth input: 2x2 taps, 4*cin_pad z-channels."""
    cout, cin = w_oihw.shape[:2]
    w = np.asarray(w_oihw, np.float32)
    wf = np.zeros((len(_TAPS_2x2) * 4 * cin_pad, cout_pad), np.float32)
    for t, (u, v) in enumerate(_TAPS_2x2):
        for a in range(2):
            for b in range(2):
                kh, kw = 2 * u + a, 2 * v + b
                if kh < 3 and kw < 3:
                    r0 = t * 4 * cin_pad + (2 * a + b) * cin_pad
                    wf[r0:r0 + cin, :cout] = w[:, :, kh, kw].T
    bf = np.zeros((cout_pad,), np.float32)
    bf[:cout] = np.asarray(bias, np.float32)
    return jnp.asarray(wf, w_dtype), jnp.asarray(bf, jnp.float32)


def _pack_conv_s1(w_oihw, bias, cin_pad, cout_pad, taps, w_dtype):
    """Stride-1 conv (3x3 / 5x5) on a spatially pre-padded input."""
    cout, cin = w_oihw.shape[:2]
    w = np.asarray(w_oihw, np.float32)
    wf = np.zeros((len(taps) * cin_pad, cout_pad), np.float32)
    for t, (dy, dx) in enumerate(taps):
        wf[t * cin_pad:t * cin_pad + cin, :cout] = w[:, :, dy, dx].T
    bf = np.zeros((cout_pad,), np.float32)
    if bias is not None:
        bf[:cout] = np.asarray(bias, np.float32)
    return jnp.asarray(wf, w_dtype), jnp.asarray(bf, jnp.float32)


def _pack_convtranspose(w_iohw, bias, cin_pad, cout_pad, w_dtype):
    """ConvTranspose2d k=4 s=2 p=1 -> 4 output phases packed on channels (g = 2r+c),
    expressed as a 3x3-tap conv over the 1-padded input."""
    cin, cout = w_iohw.shape[:2]
    w = np.asarray(w_iohw, np.float32)   # (Cin, Cout, 4, 4)  PyTorch layout
    wf = np.zeros((len(_TAPS_3x3) * cin_pad, 4 * cout_pad), np.float32)
    for t, (dy, dx) in enumerate(_TAPS_3x3):
        for r in range(2):
            for c in range(2):
                if dy in (r, r + 1) and dx in (c, c + 1):
                    ky, kx = 3 + r - 2 * dy, 3 + c - 2 * dx
                    g = 2 * r + c
                    wf[t * cin_pad:t * cin_pad + cin,
                       g * cout_pad:g * cout_pad + cout] = w[:, :, ky, kx]
    bf = np.zeros((4 * cout_pad,), np.float32)
    for g in range(4):
        bf[g * cout_pad:g * cout_pad + cout] = np.asarray(bias, np.float32)
    return jnp.asarray(wf, w_dtype), jnp.asarray(bf, jnp.float32)


# ----------------------------------------------------------------------------
# Model
# ----------------------------------------------------------------------------
class ResAutoEncoderPallas:
    def __init__(self, key, in_channel=6, num_filters=(64, 128, 128, 128),
                 n_res_block=4, compute_dtype=jnp.bfloat16):
        self.in_channel = in_channel
        self.num_filters = tuple(num_filters)
        self.n_res_block = n_res_block
        self.cdtype = compute_dtype
        self.vmem_limit = _vmem_limit_bytes()
        # TODO(synk): layer-0 only has 6 real input channels (padded to 32); its MXU K is
        # mostly zero padding -- reclaim with a reduced K packing if it shows in profiles.
        self.cin0_pad = _ceil_to(in_channel, 32)            # 4*cin0_pad is lane aligned
        self.cpad = [_ceil_to(c, LANE) for c in self.num_filters]
        cdt = compute_dtype

        def nrm(k, shape):
            return jax.random.normal(k, shape, jnp.float32) * 0.1

        keys = iter(jax.random.split(key, 64))

        # Encoder
        self.enc_raw, self.enc_packed = [], []
        c_in, c_in_pad = in_channel, self.cin0_pad
        for i, c_out in enumerate(self.num_filters):
            w = nrm(next(keys), (c_out, c_in, 3, 3))
            b = nrm(next(keys), (c_out,))
            self.enc_raw.append((w, b))
            self.enc_packed.append(_pack_conv_s2(w, b, c_in_pad, self.cpad[i], cdt))
            c_in, c_in_pad = c_out, self.cpad[i]

        # Residual blocks (stacked per-block weights for the fused kernel)
        cr, cr_pad = self.num_filters[-1], self.cpad[-1]
        self.res_raw = []
        w1s, b1s, w2s, b2s = [], [], [], []
        for _ in range(n_res_block):
            w1 = nrm(next(keys), (cr, cr, 3, 3)); b1 = nrm(next(keys), (cr,))
            w2 = nrm(next(keys), (cr, cr, 3, 3)); b2 = nrm(next(keys), (cr,))
            self.res_raw.append((w1, b1, w2, b2))
            wf1, bf1 = _pack_conv_s1(w1, b1, cr_pad, cr_pad, _TAPS_3x3, cdt)
            wf2, bf2 = _pack_conv_s1(w2, b2, cr_pad, cr_pad, _TAPS_3x3, cdt)
            w1s.append(wf1.reshape(3, 3 * cr_pad, cr_pad))
            b1s.append(bf1.reshape(1, cr_pad))
            w2s.append(wf2.reshape(3, 3 * cr_pad, cr_pad))
            b2s.append(bf2.reshape(1, cr_pad))
        if n_res_block:
            self.res_w1 = jnp.stack(w1s); self.res_b1 = jnp.stack(b1s)
            self.res_w2 = jnp.stack(w2s); self.res_b2 = jnp.stack(b2s)

        # Decoder (reversed filters)
        dec_filters = list(reversed(self.num_filters))
        self.dec_raw, self.dec_packed, self.dec_cpad = [], [], []
        c_in, c_in_pad = self.num_filters[-1], self.cpad[-1]
        for c_out in dec_filters:
            c_out_pad = _ceil_to(c_out, LANE)
            w = nrm(next(keys), (c_in, c_out, 4, 4))   # PyTorch ConvTranspose2d layout
            b = nrm(next(keys), (c_out,))
            self.dec_raw.append((w, b))
            self.dec_packed.append(_pack_convtranspose(w, b, c_in_pad, c_out_pad, cdt))
            self.dec_cpad.append(c_out_pad)
            c_in, c_in_pad = c_out, c_out_pad

        # img_reg (3ch, tanh) + att_reg (1ch, sigmoid): 5x5, no bias, fused in one conv.
        c_reg, c_reg_pad = dec_filters[-1], self.dec_cpad[-1]
        w_img = nrm(next(keys), (3, c_reg, 5, 5))
        w_att = nrm(next(keys), (1, c_reg, 5, 5))
        self.reg_raw = (w_img, w_att)
        w_cat = jnp.concatenate([w_img, w_att], axis=0)
        self.reg_packed = _pack_conv_s1(w_cat, None, c_reg_pad, LANE, _TAPS_5x5, cdt)

    # -------------------- Pallas forward --------------------
    def __call__(self, x_nchw):
        cdt, vl = self.cdtype, self.vmem_limit
        x = jnp.transpose(x_nchw, (0, 2, 3, 1)).astype(cdt)   # NCHW -> NHWC
        n, h, w, c = x.shape
        x = jnp.pad(x, ((0, 0), (0, 0), (0, 0), (0, self.cin0_pad - c)))

        # Encoder: stride-2 conv as a 2x2-tap conv over the pixel-unshuffled padded input.
        for (wf, bf) in self.enc_packed:
            ho, wo = (h - 1) // 2 + 1, (w - 1) // 2 + 1
            z = _space_to_depth_pad(x, ho, wo)
            x = _conv_im2col(z, wf, bf, 2, 2, ho, wo, act="relu",
                             out_dtype=cdt, vmem_limit=vl)
            h, w = ho, wo

        # Fused residual blocks: one pallas_call, map + all weights resident in VMEM.
        if self.n_res_block:
            x = _res_blocks_fused(x, self.res_w1, self.res_b1,
                                  self.res_w2, self.res_b2, vl)

        # Decoder: all 4 transposed-conv phases in one lane-dense conv, then depth-to-space.
        for (wf, bf), c_out_pad in zip(self.dec_packed, self.dec_cpad):
            xp = jnp.pad(x, ((0, 0), (1, 1), (1, 1), (0, 0)))
            y4 = _conv_im2col(xp, wf, bf, 3, 3, h, w, act="relu",
                              out_dtype=cdt, vmem_limit=vl)
            x = _depth_to_space(y4, c_out_pad)
            h, w = 2 * h, 2 * w

        # Regression heads: one 5x5 conv; tanh on ch 0..2 / sigmoid on ch 3 in-kernel.
        xp = jnp.pad(x, ((0, 0), (2, 2), (2, 2), (0, 0)))
        wf, bf = self.reg_packed
        y = _conv_im2col(xp, wf, bf, 5, 5, h, w, act="img_att",
                         out_dtype=cdt, vmem_limit=vl)
        y = y.astype(jnp.float32)
        img = jnp.transpose(y[..., 0:3], (0, 3, 1, 2))
        att = jnp.transpose(y[..., 3:4], (0, 3, 1, 2))
        return img, att

    # -------------------- pure-JAX reference --------------------
    def reference(self, x_nchw):
        x = x_nchw.astype(jnp.float32)

        def conv(x, w, stride, pad):
            return jax.lax.conv_general_dilated(
                x, w, window_strides=(stride, stride),
                padding=((pad, pad), (pad, pad)),
                dimension_numbers=("NCHW", "OIHW", "NCHW"))

        for (w, b) in self.enc_raw:
            x = jnp.maximum(conv(x, w, 2, 1) + b[None, :, None, None], 0.0)

        for (w1, b1, w2, b2) in self.res_raw:
            hmid = jnp.maximum(conv(x, w1, 1, 1) + b1[None, :, None, None], 0.0)
            x = x + conv(hmid, w2, 1, 1) + b2[None, :, None, None]

        for (w, b) in self.dec_raw:
            w_conv = jnp.transpose(w, (1, 0, 2, 3))[:, :, ::-1, ::-1]
            y = jax.lax.conv_general_dilated(
                x, w_conv, window_strides=(1, 1), padding=((2, 2), (2, 2)),
                lhs_dilation=(2, 2), dimension_numbers=("NCHW", "OIHW", "NCHW"))
            x = jnp.maximum(y + b[None, :, None, None], 0.0)

        w_img, w_att = self.reg_raw
        img = jnp.tanh(conv(x, w_img, 1, 2))
        att = jax.nn.sigmoid(conv(x, w_att, 1, 2))
        return img, att


if __name__ == "__main__":
    key = jax.random.PRNGKey(0)
    k_x, k_p = jax.random.split(key)

    # Small shapes consistent with ResAutoEncoder: NCHW input, 4 stride-2 encoder stages
    # (48 -> 24 -> 12 -> 6 -> 3).  48x48 also exercises the row-halo split path for the
    # 2x2 / 3x3 / 5x5 tap configurations.
    x = jax.random.normal(k_x, (2, 6, 48, 48), jnp.float32)

    # f32 path: tight correctness check against the lax.conv reference.
    model_f32 = ResAutoEncoderPallas(k_p, in_channel=6, num_filters=(8, 16, 16, 16),
                                     n_res_block=2, compute_dtype=jnp.float32)
    img, att = model_f32(x)
    img = jax.block_until_ready(img)
    att = jax.block_until_ready(att)

    img_ref, att_ref = model_f32.reference(x)
    assert img.shape == img_ref.shape == (2, 3, 48, 48), (img.shape, img_ref.shape)
    assert att.shape == att_ref.shape == (2, 1, 48, 48), (att.shape, att_ref.shape)
    np.testing.assert_allclose(np.asarray(img), np.asarray(img_ref), rtol=2e-3, atol=2e-3)
    np.testing.assert_allclose(np.asarray(att), np.asarray(att_ref), rtol=2e-3, atol=2e-3)

    # bf16 path (MXU-native production default): run + loose numerical sanity check.
    model_bf16 = ResAutoEncoderPallas(k_p, in_channel=6, num_filters=(8, 16, 16, 16),
                                      n_res_block=2, compute_dtype=jnp.bfloat16)
    img16, att16 = model_bf16(x)
    img16 = jax.block_until_ready(img16)
    att16 = jax.block_until_ready(att16)
    assert img16.shape == (2, 3, 48, 48) and att16.shape == (2, 1, 48, 48)
    np.testing.assert_allclose(np.asarray(img16), np.asarray(img_ref), rtol=0.1, atol=0.1)
    np.testing.assert_allclose(np.asarray(att16), np.asarray(att_ref), rtol=0.1, atol=0.1)

    print("KERNEL_OK")
</pallas_src>

<mosaic_0001>
module attributes {stable_mosaic.version = 11 : i64} {
  func.func @kernel(%arg0: i32, %arg1: i32, %arg2: memref<1x8x25x128xf32, #tpu.memory_space<vmem>>, %arg3: memref<1x1x25x128xf32, #tpu.memory_space<vmem>>, %arg4: memref<512x128xf32, #tpu.memory_space<vmem>>, %arg5: memref<1x128xf32, #tpu.memory_space<vmem>>, %arg6: memref<1x8x24x128xf32, #tpu.memory_space<vmem>>, %arg7: memref<9x25x128xf32, #tpu.memory_space<vmem>>) attributes {dimension_semantics = [#tpu.dimension_semantics<parallel>, #tpu.dimension_semantics<parallel>], iteration_bounds = array<i64: 2, 3>, scalar_prefetch = 0 : i64, scratch_operands = 1 : i64, tpu.core_type = #tpu.core_type<tc>, window_params = [{transform_indices = @transform_0, window_bounds = array<i64: 1, 8, 25, 128>}, {transform_indices = @transform_1, window_bounds = array<i64: 1, 1, 25, 128>}, {pipeline_mode = #tpu.pipeline_mode<synchronous>, transform_indices = @transform_2, window_bounds = array<i64: 512, 128>}, {pipeline_mode = #tpu.pipeline_mode<synchronous>, transform_indices = @transform_3, window_bounds = array<i64: 1, 128>}, {transform_indices = @transform_4, window_bounds = array<i64: 1, 8, 24, 128>}]} {
    %c0 = arith.constant 0 : index
    %c0_0 = arith.constant 0 : index
    %c0_1 = arith.constant 0 : index
    %c0_2 = arith.constant 0 : index
    %0 = vector.load %arg2[%c0, %c0_0, %c0_1, %c0_2] : memref<1x8x25x128xf32, #tpu.memory_space<vmem>>, vector<1x8x25x128xf32>
    %1 = vector.shape_cast %0 : vector<1x8x25x128xf32> to vector<8x25x128xf32>
    %c0_3 = arith.constant 0 : index
    %c0_4 = arith.constant 0 : index
    %c0_5 = arith.constant 0 : index
    %2 = vector.load %arg7[%c0_3, %c0_4, %c0_5] : memref<9x25x128xf32, #tpu.memory_space<vmem>>, vector<8x25x128xf32>
    tpu.vector_store %arg7[%c0_3, %c0_4, %c0_5], %1 {strides = array<i32>} : memref<9x25x128xf32, #tpu.memory_space<vmem>>, vector<8x25x128xf32>,
    %c0_6 = arith.constant 0 : index
    %c0_7 = arith.constant 0 : index
    %c0_8 = arith.constant 0 : index
    %c0_9 = arith.constant 0 : index
    %3 = vector.load %arg3[%c0_6, %c0_7, %c0_8, %c0_9] : memref<1x1x25x128xf32, #tpu.memory_space<vmem>>, vector<1x1x25x128xf32>
    %4 = vector.shape_cast %3 : vector<1x1x25x128xf32> to vector<1x25x128xf32>
    %c8 = arith.constant 8 : index
    %c0_10 = arith.constant 0 : index
    %c0_11 = arith.constant 0 : index
    %5 = vector.load %arg7[%c8, %c0_10, %c0_11] : memref<9x25x128xf32, #tpu.memory_space<vmem>>, vector<1x25x128xf32>
    tpu.vector_store %arg7[%c8, %c0_10, %c0_11], %4 {strides = array<i32>} : memref<9x25x128xf32, #tpu.memory_space<vmem>>, vector<1x25x128xf32>,
    %c0_12 = arith.constant 0 : index
    %c0_13 = arith.constant 0 : index
    %c0_14 = arith.constant 0 : index
    %6 = vector.load %arg7[%c0_12, %c0_13, %c0_14] : memref<9x25x128xf32, #tpu.memory_space<vmem>>, vector<8x24x128xf32>
    %c0_15 = arith.constant 0 : index
    %c1 = arith.constant 1 : index
    %c0_16 = arith.constant 0 : index
    %7 = vector.load %arg7[%c0_15, %c1, %c0_16] : memref<9x25x128xf32, #tpu.memory_space<vmem>>, vector<8x24x128xf32>
    %8 = tpu.concatenate %6, %7 in 2 : vector<8x24x128xf32>, vector<8x24x128xf32> -> vector<8x24x256xf32>
    %9 = vector.shape_cast %8 : vector<8x24x256xf32> to vector<192x256xf32>
    %c0_17 = arith.constant 0 : index
    %c0_18 = arith.constant 0 : index
    %10 = vector.load %arg4[%c0_17, %c0_18] : memref<512x128xf32, #tpu.memory_space<vmem>>, vector<256x128xf32>
    %cst = arith.constant dense<0.000000e+00> : vector<192x128xf32>
    %11 = tpu.matmul %9, %10, %cst {dimension_numbers = #tpu.dot_dimension_numbers<[1], [0], [0], [1], [0, 0, 1, 1], [], []>} : vector<192x256xf32>, vector<256x128xf32>, vector<192x128xf32> -> vector<192x128xf32>
    %c1_19 = arith.constant 1 : index
    %c0_20 = arith.constant 0 : index
    %c0_21 = arith.constant 0 : index
    %12 = vector.load %arg7[%c1_19, %c0_20, %c0_21] : memref<9x25x128xf32, #tpu.memory_space<vmem>>, vector<8x24x128xf32>
    %c1_22 = arith.constant 1 : index
    %c1_23 = arith.constant 1 : index
    %c0_24 = arith.constant 0 : index
    %13 = vector.load %arg7[%c1_22, %c1_23, %c0_24] : memref<9x25x128xf32, #tpu.memory_space<vmem>>, vector<8x24x128xf32>
    %14 = tpu.concatenate %12, %13 in 2 : vector<8x24x128xf32>, vector<8x24x128xf32> -> vector<8x24x256xf32>
    %15 = vector.shape_cast %14 : vector<8x24x256xf32> to vector<192x256xf32>
    %c256 = arith.constant 256 : index
    %c0_25 = arith.constant 0 : index
    %16 = vector.load %arg4[%c256, %c0_25] : memref<512x128xf32, #tpu.memory_space<vmem>>, vector<256x128xf32>
    %cst_26 = arith.constant dense<0.000000e+00> : vector<192x128xf32>
    %17 = tpu.matmul %15, %16, %cst_26 {dimension_numbers = #tpu.dot_dimension_numbers<[1], [0], [0], [1], [0, 0, 1, 1], [], []>} : vector<192x256xf32>, vector<256x128xf32>, vector<192x128xf32> -> vector<192x128xf32>
    %18 = arith.addf %11, %17 : vector<192x128xf32>
    %c0_27 = arith.constant 0 : index
    %c0_28 = arith.constant 0 : index
    %19 = vector.load %arg5[%c0_27, %c0_28] : memref<1x128xf32, #tpu.memory_space<vmem>>, vector<1x128xf32>
    %20 = vector.broadcast %19 : vector<1x128xf32> to vector<192x128xf32>
    %21 = arith.addf %18, %20 : vector<192x128xf32>
    %cst_29 = arith.constant 0.000000e+00 : f32
    %22 = vector.broadcast %cst_29 : f32 to vector<192x128xf32>
    %23 = arith.maximumf %21, %22 : vector<192x128xf32>
    %24 = vector.shape_cast %23 : vector<192x128xf32> to vector<8x24x128xf32>
    %c0_30 = arith.constant 0 : index
    %c0_31 = arith.constant 0 : index
    %c0_32 = arith.constant 0 : index
    %c0_33 = arith.constant 0 : index
    %25 = vector.load %arg6[%c0_30, %c0_31, %c0_32, %c0_33] : memref<1x8x24x128xf32, #tpu.memory_space<vmem>>, vector<1x8x24x128xf32>
    %26 = vector.shape_cast %25 : vector<1x8x24x128xf32> to vector<8x24x128xf32>
    %27 = vector.shape_cast %24 : vector<8x24x128xf32> to vector<1x8x24x128xf32>
    tpu.vector_store %arg6[%c0_30, %c0_31, %c0_32, %c0_33], %27 {strides = array<i32>} : memref<1x8x24x128xf32, #tpu.memory_space<vmem>>, vector<1x8x24x128xf32>,
    return
  }
  func.func @transform_0(%arg0: i32, %arg1: i32) -> (i32, i32, i32, i32) {
    %c0_i32 = arith.constant 0 : i32
    %c0_i32_0 = arith.constant 0 : i32
    %c0_i32_1 = arith.constant 0 : i32
    return %arg0, %arg1, %c0_i32, %c0_i32_0 : i32, i32, i32, i32
  }
  func.func @transform_1(%arg0: i32, %arg1: i32) -> (i32, i32, i32, i32) {
    %c1_i32 = arith.constant 1 : i32
    %0 = arith.addi %arg1, %c1_i32 : i32
    %c8_i32 = arith.constant 8 : i32
    %1 = arith.muli %0, %c8_i32 : i32
    %c0_i32 = arith.constant 0 : i32
    %c0_i32_0 = arith.constant 0 : i32
    %c0_i32_1 = arith.constant 0 : i32
    return %arg0, %1, %c0_i32, %c0_i32_0 : i32, i32, i32, i32
  }
  func.func @transform_2(%arg0: i32, %arg1: i32) -> (i32, i32) {
    %c0_i32 = arith.constant 0 : i32
    %c0_i32_0 = arith.constant 0 : i32
    %c0_i32_1 = arith.constant 0 : i32
    return %c0_i32, %c0_i32_0 : i32, i32
  }
  func.func @transform_3(%arg0: i32, %arg1: i32) -> (i32, i32) {
    %c0_i32 = arith.constant 0 : i32
    %c0_i32_0 = arith.constant 0 : i32
    %c0_i32_1 = arith.constant 0 : i32
    return %c0_i32, %c0_i32_0 : i32, i32
  }
  func.func @transform_4(%arg0: i32, %arg1: i32) -> (i32, i32, i32, i32) {
    %c0_i32 = arith.constant 0 : i32
    %c0_i32_0 = arith.constant 0 : i32
    %c0_i32_1 = arith.constant 0 : i32
    return %arg0, %arg1, %c0_i32, %c0_i32_0 : i32, i32, i32, i32
  }
}

</mosaic_0001>

<llo_original>
// kernel: tpu_custom_call.1
$region0: #{tpu_custom_call.1}
  #allocation0 [shape = 'u32[]', space=smem, size = 0x4, offset = 0x4, fixed_abs, tag = 'smem constant byte address 0x4 - core index']
  #allocation1 [shape = 'u32[144,128]{1,0:T(1,128)}', space=vmem, size = 0x12000, scoped, tag = 'internal scratch']
  #allocation2 [shape = 'f32[9,25,128]{2,1,0:T(8,128)}', space=vmem, size = 0x24000, scoped, tag = 'scratch operand']
  %s0 = inlined_call_operand.vmem [shape: f32[2,25,25,128], index: 0, kind: input, shape index: {}]
  %s1 = inlined_call_operand.vmem [shape: f32[2,25,25,128], index: 1, kind: input, shape index: {}]
  %s2 = inlined_call_operand.vmem [shape: f32[512,128], index: 2, kind: input, shape index: {}]
  %s3 = inlined_call_operand.vmem [shape: f32[1,128], index: 3, kind: input, shape index: {}]
  %s4 = inlined_call_operand.hbm [shape: f32[2,24,24,128], index: 4, kind: output, shape index: {}]
  %s5 = sld [smem:[#allocation0]]
  $region49: #{tpu_custom_call.1} parent=0
    _
  %s7 = ssub.s32 1, %s5
  %s8 = scalar_select 0, %s7, %s5
  $region1: #{tpu_custom_call.1} parent=0
    #allocation3 [shape = 'u8[196608]{0}', space=vmem, size = 0x30000, scoped, tag = 'output window, operand 0']
    #allocation4 [shape = 's32[2]{0}', space=sflag, size = 0x8, scoped, tag = 'scoped memory for tpu_custom_call.1']
    %9 = vsyncpa [#allocation4], 0
    %s10 = scalar_lea.sflag [#allocation4], 1
    %11 = vsyncpa %s10, 0
    loop: start=0, step=1, limit=8
    $region2: #{tpu_custom_call.1} parent=1 // loop_pre_header
      _
    $region3: #{tpu_custom_call.1} parent=1 // loop_header
      %s13 = sphi 0, %s17
      %p14 = scmp.ge.s32.totalorder %s13, 8
      %s20 = sphi 0, %s32
      %s21 = sphi 0, %s28
      %s22 = sphi 0, %s20
      %s23 = sphi 0, %s21
      %s24 = sphi 0, %s22
      %s25 = sphi 0, %s23
      %s37 = sphi 0, %s39
      %s40 = sphi 0, %s37
      %s41 = sphi 0, %s40
      %s57 = sphi 0, %s41
      %s69 = sphi 0, %s71
      %s72 = sphi 0, %s69
      %s73 = sphi 0, %s72
      %s89 = sphi 0, %s73
      %s93 = sphi 0, %s93
      %s95 = sphi 0, %s93
      %s96 = sphi 0, %s95
      %s110 = sphi 0, %s96
      %s114 = sphi 0, %s114
      %s116 = sphi 0, %s114
      %s117 = sphi 0, %s116
      %s131 = sphi 0, %s117
      %s139 = sphi 0, %s141
      %s142 = sphi 0, %s139
      %s143 = sphi 0, %s142
      %s159 = sphi 0, %s143
    $region4: #{tpu_custom_call.1} parent=1 // loop_header_branch
      %16 = sbr.rel (%p14) target = $region8
    $region5: #{tpu_custom_call.1} parent=1 // loop_body
      %s18 = ssub.s32 %s13, 1
      %s19 = ssub.s32 %s13, 2
      %s26 = sadd.s32 1, %s21
      %p27 = scmp.ge.s32.totalorder %s26, 3
      %s28 = scalar_select %p27, 0, %s26
      %s29 = sadd.s32 1, %s20
      %s30 = scalar_select %p27, %s29, %s20
      %p31 = scmp.ge.s32.totalorder %s30, 2
      %s32 = scalar_select %p31, 0, %s30
      %s33 = ssub.s32 %s20, %s32
      %s34 = ssub.s32 %s21, %s28
      %s35 = sor.u32 %s33, %s34
      %p36 = scmp.eq.s32.totalorder %s35, 0
      %s38 = sadd.s32 %s37, 1
      %s39 = scalar_select %p36, %s37, %s38
      %p42 = pneg %p36
      %p43 = scmp.eq.s32.totalorder %s13, 5
      %p44 = por %p42, %p43
      %p45 = scmp.ne.s32.totalorder %s37, %s40
      %p46 = scmp.eq.s32.totalorder %s13, 0
      %p47 = por %p45, %p46
      %p48 = scmp.ne.s32.totalorder %s37, %s40
      %p49 = scmp.eq.s32.totalorder %s18, 5
      %p50 = por %p48, %p49
      %p51 = scmp.ne.s32.totalorder %s40, %s41
      %p52 = scmp.eq.s32.totalorder %s18, 0
      %p53 = por %p51, %p52
      %p54 = scmp.ne.s32.totalorder %s40, %s41
      %p55 = scmp.eq.s32.totalorder %s19, 5
      %p56 = por %p54, %p55
      %p58 = scmp.ne.s32.totalorder %s41, %s57
      %p59 = scmp.eq.s32.totalorder %s19, 0
      %p60 = por %p58, %p59
      %s61 = sadd.s32 %s21, 1
      %s62 = smul.u32 %s61, 8
      %s63 = sadd.s32 %s28, 1
      %s64 = smul.u32 %s63, 8
      %s65 = ssub.s32 %s20, %s32
      %s66 = ssub.s32 %s62, %s64
      %s67 = sor.u32 %s65, %s66
      %p68 = scmp.eq.s32.totalorder %s67, 0
      %s70 = sadd.s32 %s69, 1
      %s71 = scalar_select %p68, %s69, %s70
      %p74 = pneg %p68
      %p75 = scmp.eq.s32.totalorder %s13, 5
      %p76 = por %p74, %p75
      %p77 = scmp.ne.s32.totalorder %s69, %s72
      %p78 = scmp.eq.s32.totalorder %s13, 0
      %p79 = por %p77, %p78
      %p80 = scmp.ne.s32.totalorder %s69, %s72
      %p81 = scmp.eq.s32.totalorder %s18, 5
      %p82 = por %p80, %p81
      %p83 = scmp.ne.s32.totalorder %s72, %s73
      %p84 = scmp.eq.s32.totalorder %s18, 0
      %p85 = por %p83, %p84
      %p86 = scmp.ne.s32.totalorder %s72, %s73
      %p87 = scmp.eq.s32.totalorder %s19, 5
      %p88 = por %p86, %p87
      %p90 = scmp.ne.s32.totalorder %s73, %s89
      %p91 = scmp.eq.s32.totalorder %s19, 0
      %p92 = por %p90, %p91
      %s94 = sadd.s32 %s93, 1
      %p97 = scmp.eq.s32.totalorder %s13, 5
      %p98 = scmp.ne.s32.totalorder %s93, %s95
      %p99 = scmp.eq.s32.totalorder %s13, 0
      %p100 = por %p98, %p99
      %p101 = scmp.ne.s32.totalorder %s93, %s95
      %p102 = scmp.eq.s32.totalorder %s18, 5
      %p103 = por %p101, %p102
      %p104 = scmp.ne.s32.totalorder %s95, %s96
      %p105 = scmp.eq.s32.totalorder %s18, 0
      %p106 = por %p104, %p105
      %p107 = scmp.ne.s32.totalorder %s95, %s96
      %p108 = scmp.eq.s32.totalorder %s19, 5
      %p109 = por %p107, %p108
      %p111 = scmp.ne.s32.totalorder %s96, %s110
      %p112 = scmp.eq.s32.totalorder %s19, 0
      %p113 = por %p111, %p112
      %s115 = sadd.s32 %s114, 1
      %p118 = scmp.eq.s32.totalorder %s13, 5
      %p119 = scmp.ne.s32.totalorder %s114, %s116
      %p120 = scmp.eq.s32.totalorder %s13, 0
      %p121 = por %p119, %p120
      %p122 = scmp.ne.s32.totalorder %s114, %s116
      %p123 = scmp.eq.s32.totalorder %s18, 5
      %p124 = por %p122, %p123
      %p125 = scmp.ne.s32.totalorder %s116, %s117
      %p126 = scmp.eq.s32.totalorder %s18, 0
      %p127 = por %p125, %p126
      %p128 = scmp.ne.s32.totalorder %s116, %s117
      %p129 = scmp.eq.s32.totalorder %s19, 5
      %p130 = por %p128, %p129
      %p132 = scmp.ne.s32.totalorder %s117, %s131
      %p133 = scmp.eq.s32.totalorder %s19, 0
      %p134 = por %p132, %p133
      %s135 = ssub.s32 %s20, %s32
      %s136 = ssub.s32 %s21, %s28
      %s137 = sor.u32 %s135, %s136
      %p138 = scmp.eq.s32.totalorder %s137, 0
      %s140 = sadd.s32 %s139, 1
      %s141 = scalar_select %p138, %s139, %s140
      %p144 = pneg %p138
      %p145 = scmp.eq.s32.totalorder %s13, 5
      %p146 = por %p144, %p145
      %p147 = scmp.ne.s32.totalorder %s139, %s142
      %p148 = scmp.eq.s32.totalorder %s13, 0
      %p149 = por %p147, %p148
      %p150 = scmp.ne.s32.totalorder %s139, %s142
      %p151 = scmp.eq.s32.totalorder %s18, 5
      %p152 = por %p150, %p151
      %p153 = scmp.ne.s32.totalorder %s142, %s143
      %p154 = scmp.eq.s32.totalorder %s18, 0
      %p155 = por %p153, %p154
      %p156 = scmp.ne.s32.totalorder %s142, %s143
      %p157 = scmp.eq.s32.totalorder %s19, 5
      %p158 = por %p156, %p157
      %p160 = scmp.ne.s32.totalorder %s143, %s159
      %p161 = scmp.eq.s32.totalorder %s19, 0
      %p162 = por %p160, %p161
      %p163 = scmp.le.s32.totalorder 1, %s13
      %p164 = scmp.lt.s32.totalorder %s13, 7
      %p165 = pnand %p163, %p164
      %p166 = pneg %p165
      // Predicated region
      $region9: #{tpu_custom_call.1} parent=5 // pred_check
        _
      $region10: #{tpu_custom_call.1} parent=5 // pred_check_branch
        %168 = sbr.rel (%p165) target = $region12
      $region11: #{tpu_custom_call.1} parent=5 // pred_region
        %s169 = ssub.s32 %s13, 1
        // Predicated region
        $region13: #{tpu_custom_call.1} parent=11 // pred_check
          %p170 = pneg %p106
        $region14: #{tpu_custom_call.1} parent=11 // pred_check_branch
          %172 = sbr.rel (%p170) target = $region16
        $region15: #{tpu_custom_call.1} parent=11 // pred_region
          _
        $region16: #{tpu_custom_call.1} parent=11 // pred_fallthru
          _
        // Predicated region
        $region17: #{tpu_custom_call.1} parent=11 // pred_check
          %p173 = pneg %p127
        $region18: #{tpu_custom_call.1} parent=11 // pred_check_branch
          %175 = sbr.rel (%p173) target = $region20
        $region19: #{tpu_custom_call.1} parent=11 // pred_region
          _
        $region20: #{tpu_custom_call.1} parent=11 // pred_fallthru
          _
      $region12: #{tpu_custom_call.1} parent=5 // pred_fallthru
        _
      %p176 = scmp.lt.s32.totalorder %s13, 6
      // Predicated region
      $region21: #{tpu_custom_call.1} parent=5 // pred_check
        %p177 = pneg %p176
      $region22: #{tpu_custom_call.1} parent=5 // pred_check_branch
        %179 = sbr.rel (%p177) target = $region24
      $region23: #{tpu_custom_call.1} parent=5 // pred_region
        // Predicated region
        $region25: #{tpu_custom_call.1} parent=23 // pred_check
          %p180 = pneg %p47
        $region26: #{tpu_custom_call.1} parent=23 // pred_check_branch
          %182 = sbr.rel (%p180) target = $region28
        $region27: #{tpu_custom_call.1} parent=23 // pred_region
          %s183 = smul.u32 8, %s21
          %s184 = ssub.s32 25, %s183
          %p185 = scmp.lt.s32.totalorder %s184, 8
          %s186 = scalar_select %p185, %s184, 8
          %s187 = smul.u32 128, %s186
          %s188 = smul.u32 %s187, 4
          %p189 = scmp.lt.s32.totalorder %s20, 1
          %s190 = scalar_select %p189, %s20, 1
          %p191 = scmp.lt.s32.totalorder %s183, 24
          %s192 = scalar_select %p191, %s183, 24
          %s193 = smul.addr %s192, 4
          %s194 = smul.addr %s190, 100
          %s195 = sadd.s32 %s193, %s194
          %s196 = smul.addr %s195, 8
          %s197 = scalar_lea.vmem %s0, %s196
          %s198 = smul.u32 8, %s21
          %s199 = ssub.s32 25, %s198
          %p200 = scmp.lt.s32.totalorder %s199, 8
          %s201 = scalar_select %p200, %s199, 8
          %s202 = smul.u32 128, %s201
          %s203 = smul.u32 %s202, 4
        $region28: #{tpu_custom_call.1} parent=23 // pred_fallthru
          _
        // Predicated region
        $region29: #{tpu_custom_call.1} parent=23 // pred_check
          %p204 = pneg %p79
        $region30: #{tpu_custom_call.1} parent=23 // pred_check_branch
          %206 = sbr.rel (%p204) target = $region32
        $region31: #{tpu_custom_call.1} parent=23 // pred_region
          %s207 = sadd.s32 %s21, 1
          %s208 = smul.u32 %s207, 8
          %p209 = scmp.lt.s32.totalorder %s20, 1
          %s210 = scalar_select %p209, %s20, 1
          %p211 = scmp.lt.s32.totalorder %s208, 24
          %s212 = scalar_select %p211, %s208, 24
          %s213 = smul.addr %s212, 4
          %s214 = smul.addr %s210, 100
          %s215 = sadd.s32 %s213, %s214
          %s216 = smul.addr %s215, 8
          %s217 = scalar_lea.vmem %s1, %s216
          %s218 = sadd.s32 %s21, 1
          %s219 = smul.u32 %s218, 8
        $region32: #{tpu_custom_call.1} parent=23 // pred_fallthru
          _
      $region24: #{tpu_custom_call.1} parent=5 // pred_fallthru
        _
      %p220 = scmp.le.s32.totalorder 1, %s13
      %p221 = scmp.lt.s32.totalorder %s13, 7
      %p222 = pnand %p220, %p221
      %p223 = pneg %p222
      // Predicated region
      $region33: #{tpu_custom_call.1} parent=5 // pred_check
        _
      $region34: #{tpu_custom_call.1} parent=5 // pred_check_branch
        %225 = sbr.rel (%p222) target = $region36
      $region35: #{tpu_custom_call.1} parent=5 // pred_region
        %s226 = ssub.s32 %s13, 1
        %s227 = smul.u32 8, %s23
        %s228 = ssub.s32 25, %s227
        %p229 = scmp.lt.s32.totalorder %s228, 8
        %s230 = scalar_select %p229, %s228, 8
        %s231 = smul.u32 128, %s230
        %s232 = smul.u32 %s231, 4
        %p233 = scmp.lt.s32.totalorder %s22, 1
        %s234 = scalar_select %p233, %s22, 1
        %p235 = scmp.lt.s32.totalorder %s227, 24
        %s236 = scalar_select %p235, %s227, 24
        %s237 = smul.addr %s236, 4
        %s238 = smul.addr %s234, 100
        %s239 = sadd.s32 %s237, %s238
        %s240 = smul.addr %s239, 8
        %s241 = scalar_lea.vmem %s0, %s240
        %p242 = pneg %p53
        %p243 = pneg %p50
        %s244 = sadd.s32 %s23, 1
        %s245 = smul.u32 %s244, 8
        %p246 = scmp.lt.s32.totalorder %s22, 1
        %s247 = scalar_select %p246, %s22, 1
        %p248 = scmp.lt.s32.totalorder %s245, 24
        %s249 = scalar_select %p248, %s245, 24
        %s250 = smul.addr %s249, 4
        %s251 = smul.addr %s247, 100
        %s252 = sadd.s32 %s250, %s251
        %s253 = smul.addr %s252, 8
        %s254 = scalar_lea.vmem %s1, %s253
        %p255 = pneg %p85
        %p256 = pneg %p82
        %p257 = pneg %p106
        %p258 = pneg %p103
        %p259 = pneg %p127
        %p260 = pneg %p124
        %p261 = pneg %p155
        %p262 = pneg %p152
        %s263 = sand.u32 %s142, 1
        %s264 = scalar_lea.sflag [#allocation4], %s263
        %s265 = sand.u32 %s142, 1
        %s266 = smul.addr %s265, 192
        %s267 = scalar_lea.vmem [#allocation3], %s266
        %s268 = smul.u32 8, %s23
        %s269 = ssub.s32 25, %s268
        %p270 = scmp.lt.s32.totalorder %s269, 8
        %s271 = scalar_select %p270, %s269, 8
        %s272 = smul.u32 128, %s271
        %s273 = smul.u32 %s272, 4
        %p274 = scmp.lt.s32.totalorder %s22, 1
        %s275 = scalar_select %p274, %s22, 1
        %p276 = scmp.lt.s32.totalorder %s268, 24
        %s277 = scalar_select %p276, %s268, 24
        %s278 = smul.addr %s277, 4
        %s279 = smul.addr %s275, 100
        %s280 = sadd.s32 %s278, %s279
        %s281 = smul.addr %s280, 8
        %s282 = scalar_lea.vmem %s0, %s281
        %s283 = smul.u32 8, %s23
        %s284 = ssub.s32 25, %s283
        %p285 = scmp.lt.s32.totalorder %s284, 8
        %s286 = scalar_select %p285, %s284, 8
        %s287 = smul.u32 128, %s286
        %s288 = smul.u32 %s287, 4
        %s289 = sadd.s32 %s23, 1
        %s290 = smul.u32 %s289, 8
        %p291 = scmp.lt.s32.totalorder %s22, 1
        %s292 = scalar_select %p291, %s22, 1
        %p293 = scmp.lt.s32.totalorder %s290, 24
        %s294 = scalar_select %p293, %s290, 24
        %s295 = smul.addr %s294, 4
        %s296 = smul.addr %s292, 100
        %s297 = sadd.s32 %s295, %s296
        %s298 = smul.addr %s297, 8
        %s299 = scalar_lea.vmem %s1, %s298
        %s300 = sadd.s32 %s23, 1
        %s301 = smul.u32 %s300, 8
        %s302 = smul.u32 8, %s23
        %v303 = vld [vmem:[%s282] sm:$0xff]
        %v304 = vld [vmem:[%s282 + $0x8] sm:$0xff]
        %v305 = vld [vmem:[%s282 + $0x10] sm:$0xff]
        %v306 = vld [vmem:[%s282 + $0x18] sm:$0x1]
        %v307 = vld [vmem:[%s282 + $0x20] sm:$0xff]
        %v308 = vld [vmem:[%s282 + $0x28] sm:$0xff]
        %v309 = vld [vmem:[%s282 + $0x30] sm:$0xff]
        %v310 = vld [vmem:[%s282 + $0x38] sm:$0x1]
        %v311 = vld [vmem:[%s282 + $0x40] sm:$0xff]
        %v312 = vld [vmem:[%s282 + $0x48] sm:$0xff]
        %v313 = vld [vmem:[%s282 + $0x50] sm:$0xff]
        %v314 = vld [vmem:[%s282 + $0x58] sm:$0x1]
        %v315 = vld [vmem:[%s282 + $0x60] sm:$0xff]
        %v316 = vld [vmem:[%s282 + $0x68] sm:$0xff]
        %v317 = vld [vmem:[%s282 + $0x70] sm:$0xff]
        %v318 = vld [vmem:[%s282 + $0x78] sm:$0x1]
        %v319 = vld [vmem:[%s282 + $0x80] sm:$0xff]
        %v320 = vld [vmem:[%s282 + $0x88] sm:$0xff]
        %v321 = vld [vmem:[%s282 + $0x90] sm:$0xff]
        %v322 = vld [vmem:[%s282 + $0x98] sm:$0x1]
        %v323 = vld [vmem:[%s282 + $0xa0] sm:$0xff]
        %v324 = vld [vmem:[%s282 + $0xa8] sm:$0xff]
        %v325 = vld [vmem:[%s282 + $0xb0] sm:$0xff]
        %v326 = vld [vmem:[%s282 + $0xb8] sm:$0x1]
        %v327 = vld [vmem:[%s282 + $0xc0] sm:$0xff]
        %v328 = vld [vmem:[%s282 + $0xc8] sm:$0xff]
        %v329 = vld [vmem:[%s282 + $0xd0] sm:$0xff]
        %v330 = vld [vmem:[%s282 + $0xd8] sm:$0x1]
        %v331 = vld [vmem:[%s282 + $0xe0] sm:$0xff]
        %v332 = vld [vmem:[%s282 + $0xe8] sm:$0xff]
        %v333 = vld [vmem:[%s282 + $0xf0] sm:$0xff]
        %v334 = vld [vmem:[%s282 + $0xf8] sm:$0x1]
        %335 = vst [vmem:[#allocation2] sm:$0xff] %v303
        %336 = vst [vmem:[#allocation2 + $0x8] sm:$0xff] %v304
        %337 = vst [vmem:[#allocation2 + $0x10] sm:$0xff] %v305
        %338 = vst [vmem:[#allocation2 + $0x18] sm:$0x1] %v306
        %339 = vst [vmem:[#allocation2 + $0x20] sm:$0xff] %v307
        %340 = vst [vmem:[#allocation2 + $0x28] sm:$0xff] %v308
        %341 = vst [vmem:[#allocation2 + $0x30] sm:$0xff] %v309
        %342 = vst [vmem:[#allocation2 + $0x38] sm:$0x1] %v310
        %343 = vst [vmem:[#allocation2 + $0x40] sm:$0xff] %v311
        %344 = vst [vmem:[#allocation2 + $0x48] sm:$0xff] %v312
        %345 = vst [vmem:[#allocation2 + $0x50] sm:$0xff] %v313
        %346 = vst [vmem:[#allocation2 + $0x58] sm:$0x1] %v314
        %347 = vst [vmem:[#allocation2 + $0x60] sm:$0xff] %v315
        %348 = vst [vmem:[#allocation2 + $0x68] sm:$0xff] %v316
        %349 = vst [vmem:[#allocation2 + $0x70] sm:$0xff] %v317
        %350 = vst [vmem:[#allocation2 + $0x78] sm:$0x1] %v318
        %351 = vst [vmem:[#allocation2 + $0x80] sm:$0xff] %v319
        %352 = vst [vmem:[#allocation2 + $0x88] sm:$0xff] %v320
        %353 = vst [vmem:[#allocation2 + $0x90] sm:$0xff] %v321
        %354 = vst [vmem:[#allocation2 + $0x98] sm:$0x1] %v322
        %355 = vst [vmem:[#allocation2 + $0xa0] sm:$0xff] %v323
        %356 = vst [vmem:[#allocation2 + $0xa8] sm:$0xff] %v324
        %357 = vst [vmem:[#allocation2 + $0xb0] sm:$0xff] %v325
        %358 = vst [vmem:[#allocation2 + $0xb8] sm:$0x1] %v326
        %359 = vst [vmem:[#allocation2 + $0xc0] sm:$0xff] %v327
        %360 = vst [vmem:[#allocation2 + $0xc8] sm:$0xff] %v328
        %361 = vst [vmem:[#allocation2 + $0xd0] sm:$0xff] %v329
        %362 = vst [vmem:[#allocation2 + $0xd8] sm:$0x1] %v330
        %363 = vst [vmem:[#allocation2 + $0xe0] sm:$0xff] %v331
        %364 = vst [vmem:[#allocation2 + $0xe8] sm:$0xff] %v332
        %365 = vst [vmem:[#allocation2 + $0xf0] sm:$0xff] %v333
        %366 = vst [vmem:[#allocation2 + $0xf8] sm:$0x1] %v334
        %v367 = vld [vmem:[%s299] sm:$0xff]
        %v368 = vld [vmem:[%s299 + $0x8] sm:$0xff]
        %v369 = vld [vmem:[%s299 + $0x10] sm:$0xff]
        %v370 = vld [vmem:[%s299 + $0x18] sm:$0x1]
        %s371 = scalar_lea.vmem [#allocation2], 256
        %372 = vst [vmem:[%s371] sm:$0xff] %v367
        %373 = vst [vmem:[%s371 + $0x8] sm:$0xff] %v368
        %374 = vst [vmem:[%s371 + $0x10] sm:$0xff] %v369
        %375 = vst [vmem:[%s371 + $0x18] sm:$0x1] %v370
        %v376 = vld [vmem:[#allocation2] sm:$0xff]
        %v377 = vld [vmem:[#allocation2 + $0x8] sm:$0xff]
        %v378 = vld [vmem:[#allocation2 + $0x10] sm:$0xff]
        %v379 = vld [vmem:[#allocation2 + $0x20] sm:$0xff]
        %v380 = vld [vmem:[#allocation2 + $0x28] sm:$0xff]
        %v381 = vld [vmem:[#allocation2 + $0x30] sm:$0xff]
        %v382 = vld [vmem:[#allocation2 + $0x40] sm:$0xff]
        %v383 = vld [vmem:[#allocation2 + $0x48] sm:$0xff]
        %v384 = vld [vmem:[#allocation2 + $0x50] sm:$0xff]
        %v385 = vld [vmem:[#allocation2 + $0x60] sm:$0xff]
        %v386 = vld [vmem:[#allocation2 + $0x68] sm:$0xff]
        %v387 = vld [vmem:[#allocation2 + $0x70] sm:$0xff]
        %v388 = vld [vmem:[#allocation2 + $0x80] sm:$0xff]
        %v389 = vld [vmem:[#allocation2 + $0x88] sm:$0xff]
        %v390 = vld [vmem:[#allocation2 + $0x90] sm:$0xff]
        %v391 = vld [vmem:[#allocation2 + $0xa0] sm:$0xff]
        %v392 = vld [vmem:[#allocation2 + $0xa8] sm:$0xff]
        %v393 = vld [vmem:[#allocation2 + $0xb0] sm:$0xff]
        %v394 = vld [vmem:[#allocation2 + $0xc0] sm:$0xff]
        %v395 = vld [vmem:[#allocation2 + $0xc8] sm:$0xff]
        %v396 = vld [vmem:[#allocation2 + $0xd0] sm:$0xff]
        %v397 = vld [vmem:[#allocation2 + $0xe0] sm:$0xff]
        %v398 = vld [vmem:[#allocation2 + $0xe8] sm:$0xff]
        %v399 = vld [vmem:[#allocation2 + $0xf0] sm:$0xff]
        %v400 = vld [vmem:[#allocation2 + $0x1] sm:$0xff]
        %v401 = vld [vmem:[#allocation2 + $0x9] sm:$0xff]
        %v402 = vld [vmem:[#allocation2 + $0x11] sm:$0xff]
        %v403 = vld [vmem:[#allocation2 + $0x21] sm:$0xff]
        %v404 = vld [vmem:[#allocation2 + $0x29] sm:$0xff]
        %v405 = vld [vmem:[#allocation2 + $0x31] sm:$0xff]
        %v406 = vld [vmem:[#allocation2 + $0x41] sm:$0xff]
        %v407 = vld [vmem:[#allocation2 + $0x49] sm:$0xff]
        %v408 = vld [vmem:[#allocation2 + $0x51] sm:$0xff]
        %v409 = vld [vmem:[#allocation2 + $0x61] sm:$0xff]
        %v410 = vld [vmem:[#allocation2 + $0x69] sm:$0xff]
        %v411 = vld [vmem:[#allocation2 + $0x71] sm:$0xff]
        %v412 = vld [vmem:[#allocation2 + $0x81] sm:$0xff]
        %v413 = vld [vmem:[#allocation2 + $0x89] sm:$0xff]
        %v414 = vld [vmem:[#allocation2 + $0x91] sm:$0xff]
        %v415 = vld [vmem:[#allocation2 + $0xa1] sm:$0xff]
        %v416 = vld [vmem:[#allocation2 + $0xa9] sm:$0xff]
        %v417 = vld [vmem:[#allocation2 + $0xb1] sm:$0xff]
        %v418 = vld [vmem:[#allocation2 + $0xc1] sm:$0xff]
        %v419 = vld [vmem:[#allocation2 + $0xc9] sm:$0xff]
        %v420 = vld [vmem:[#allocation2 + $0xd1] sm:$0xff]
        %v421 = vld [vmem:[#allocation2 + $0xe1] sm:$0xff]
        %v422 = vld [vmem:[#allocation2 + $0xe9] sm:$0xff]
        %v423 = vld [vmem:[#allocation2 + $0xf1] sm:$0xff]
        %v424 = vld [vmem:[%s2] sm:$0xff]
        %v425 = vld [vmem:[%s2 + $0x8] sm:$0xff]
        %v426 = vld [vmem:[%s2 + $0x10] sm:$0xff]
        %v427 = vld [vmem:[%s2 + $0x18] sm:$0xff]
        %v428 = vld [vmem:[%s2 + $0x20] sm:$0xff]
        %v429 = vld [vmem:[%s2 + $0x28] sm:$0xff]
        %v430 = vld [vmem:[%s2 + $0x30] sm:$0xff]
        %v431 = vld [vmem:[%s2 + $0x38] sm:$0xff]
        %v432 = vld [vmem:[%s2 + $0x40] sm:$0xff]
        %v433 = vld [vmem:[%s2 + $0x48] sm:$0xff]
        %v434 = vld [vmem:[%s2 + $0x50] sm:$0xff]
        %v435 = vld [vmem:[%s2 + $0x58] sm:$0xff]
        %v436 = vld [vmem:[%s2 + $0x60] sm:$0xff]
        %v437 = vld [vmem:[%s2 + $0x68] sm:$0xff]
        %v438 = vld [vmem:[%s2 + $0x70] sm:$0xff]
        %v439 = vld [vmem:[%s2 + $0x78] sm:$0xff]
        %v440 = vld [vmem:[%s2 + $0x80] sm:$0xff]
        %v441 = vld [vmem:[%s2 + $0x88] sm:$0xff]
        %v442 = vld [vmem:[%s2 + $0x90] sm:$0xff]
        %v443 = vld [vmem:[%s2 + $0x98] sm:$0xff]
        %v444 = vld [vmem:[%s2 + $0xa0] sm:$0xff]
        %v445 = vld [vmem:[%s2 + $0xa8] sm:$0xff]
        %v446 = vld [vmem:[%s2 + $0xb0] sm:$0xff]
        %v447 = vld [vmem:[%s2 + $0xb8] sm:$0xff]
        %v448 = vld [vmem:[%s2 + $0xc0] sm:$0xff]
        %v449 = vld [vmem:[%s2 + $0xc8] sm:$0xff]
        %v450 = vld [vmem:[%s2 + $0xd0] sm:$0xff]
        %v451 = vld [vmem:[%s2 + $0xd8] sm:$0xff]
        %v452 = vld [vmem:[%s2 + $0xe0] sm:$0xff]
        %v453 = vld [vmem:[%s2 + $0xe8] sm:$0xff]
        %v454 = vld [vmem:[%s2 + $0xf0] sm:$0xff]
        %v455 = vld [vmem:[%s2 + $0xf8] sm:$0xff]
        %s456 = scalar_lea.vmem [#allocation2], 32
        %v457 = vld [vmem:[%s456] sm:$0xff]
        %v458 = vld [vmem:[%s456 + $0x8] sm:$0xff]
        %v459 = vld [vmem:[%s456 + $0x10] sm:$0xff]
        %v460 = vld [vmem:[%s456 + $0x20] sm:$0xff]
        %v461 = vld [vmem:[%s456 + $0x28] sm:$0xff]
        %v462 = vld [vmem:[%s456 + $0x30] sm:$0xff]
        %v463 = vld [vmem:[%s456 + $0x40] sm:$0xff]
        %v464 = vld [vmem:[%s456 + $0x48] sm:$0xff]
        %v465 = vld [vmem:[%s456 + $0x50] sm:$0xff]
        %v466 = vld [vmem:[%s456 + $0x60] sm:$0xff]
        %v467 = vld [vmem:[%s456 + $0x68] sm:$0xff]
        %v468 = vld [vmem:[%s456 + $0x70] sm:$0xff]
        %v469 = vld [vmem:[%s456 + $0x80] sm:$0xff]
        %v470 = vld [vmem:[%s456 + $0x88] sm:$0xff]
        %v471 = vld [vmem:[%s456 + $0x90] sm:$0xff]
        %v472 = vld [vmem:[%s456 + $0xa0] sm:$0xff]
        %v473 = vld [vmem:[%s456 + $0xa8] sm:$0xff]
        %v474 = vld [vmem:[%s456 + $0xb0] sm:$0xff]
        %v475 = vld [vmem:[%s456 + $0xc0] sm:$0xff]
        %v476 = vld [vmem:[%s456 + $0xc8] sm:$0xff]
        %v477 = vld [vmem:[%s456 + $0xd0] sm:$0xff]
        %v478 = vld [vmem:[%s456 + $0xe0] sm:$0xff]
        %v479 = vld [vmem:[%s456 + $0xe8] sm:$0xff]
        %v480 = vld [vmem:[%s456 + $0xf0] sm:$0xff]
        %v481 = vld [vmem:[%s456 + $0x1] sm:$0xff]
        %v482 = vld [vmem:[%s456 + $0x9] sm:$0xff]
        %v483 = vld [vmem:[%s456 + $0x11] sm:$0xff]
        %v484 = vld [vmem:[%s456 + $0x21] sm:$0xff]
        %v485 = vld [vmem:[%s456 + $0x29] sm:$0xff]
        %v486 = vld [vmem:[%s456 + $0x31] sm:$0xff]
        %v487 = vld [vmem:[%s456 + $0x41] sm:$0xff]
        %v488 = vld [vmem:[%s456 + $0x49] sm:$0xff]
        %v489 = vld [vmem:[%s456 + $0x51] sm:$0xff]
        %v490 = vld [vmem:[%s456 + $0x61] sm:$0xff]
        %v491 = vld [vmem:[%s456 + $0x69] sm:$0xff]
        %v492 = vld [vmem:[%s456 + $0x71] sm:$0xff]
        %v493 = vld [vmem:[%s456 + $0x81] sm:$0xff]
        %v494 = vld [vmem:[%s456 + $0x89] sm:$0xff]
        %v495 = vld [vmem:[%s456 + $0x91] sm:$0xff]
        %v496 = vld [vmem:[%s456 + $0xa1] sm:$0xff]
        %v497 = vld [vmem:[%s456 + $0xa9] sm:$0xff]
        %v498 = vld [vmem:[%s456 + $0xb1] sm:$0xff]
        %v499 = vld [vmem:[%s456 + $0xc1] sm:$0xff]
        %v500 = vld [vmem:[%s456 + $0xc9] sm:$0xff]
        %v501 = vld [vmem:[%s456 + $0xd1] sm:$0xff]
        %v502 = vld [vmem:[%s456 + $0xe1] sm:$0xff]
        %v503 = vld [vmem:[%s456 + $0xe9] sm:$0xff]
        %v504 = vld [vmem:[%s456 + $0xf1] sm:$0xff]
        %v505 = vld [vmem:[%s2 + $0x100] sm:$0xff]
        %v506 = vld [vmem:[%s2 + $0x108] sm:$0xff]
        %v507 = vld [vmem:[%s2 + $0x110] sm:$0xff]
        %v508 = vld [vmem:[%s2 + $0x118] sm:$0xff]
        %v509 = vld [vmem:[%s2 + $0x120] sm:$0xff]
        %v510 = vld [vmem:[%s2 + $0x128] sm:$0xff]
        %v511 = vld [vmem:[%s2 + $0x130] sm:$0xff]
        %v512 = vld [vmem:[%s2 + $0x138] sm:$0xff]
        %v513 = vld [vmem:[%s2 + $0x140] sm:$0xff]
        %v514 = vld [vmem:[%s2 + $0x148] sm:$0xff]
        %v515 = vld [vmem:[%s2 + $0x150] sm:$0xff]
        %v516 = vld [vmem:[%s2 + $0x158] sm:$0xff]
        %v517 = vld [vmem:[%s2 + $0x160] sm:$0xff]
        %v518 = vld [vmem:[%s2 + $0x168] sm:$0xff]
        %v519 = vld [vmem:[%s2 + $0x170] sm:$0xff]
        %v520 = vld [vmem:[%s2 + $0x178] sm:$0xff]
        %v521 = vld [vmem:[%s2 + $0x180] sm:$0xff]
        %v522 = vld [vmem:[%s2 + $0x188] sm:$0xff]
        %v523 = vld [vmem:[%s2 + $0x190] sm:$0xff]
        %v524 = vld [vmem:[%s2 + $0x198] sm:$0xff]
        %v525 = vld [vmem:[%s2 + $0x1a0] sm:$0xff]
        %v526 = vld [vmem:[%s2 + $0x1a8] sm:$0xff]
        %v527 = vld [vmem:[%s2 + $0x1b0] sm:$0xff]
        %v528 = vld [vmem:[%s2 + $0x1b8] sm:$0xff]
        %v529 = vld [vmem:[%s2 + $0x1c0] sm:$0xff]
        %v530 = vld [vmem:[%s2 + $0x1c8] sm:$0xff]
        %v531 = vld [vmem:[%s2 + $0x1d0] sm:$0xff]
        %v532 = vld [vmem:[%s2 + $0x1d8] sm:$0xff]
        %v533 = vld [vmem:[%s2 + $0x1e0] sm:$0xff]
        %v534 = vld [vmem:[%s2 + $0x1e8] sm:$0xff]
        %v535 = vld [vmem:[%s2 + $0x1f0] sm:$0xff]
        %v536 = vld [vmem:[%s2 + $0x1f8] sm:$0xff]
        %537 = vmatprep.subr.mxu0 0.0
        %538 = vmatpush1.msra.mxu0 %v520
        %539 = vmatprep.subr.mxu0 0.0
        %540 = vmatpush1.msra.mxu0 %v519
        %541 = vmatprep.subr.mxu0 0.0
        %542 = vmatpush1.msra.mxu0 %v518
        %543 = vmatprep.subr.mxu0 0.0
        %544 = vmatpush1.msra.mxu0 %v517
        %545 = vmatprep.subr.mxu0 0.0
        %546 = vmatpush1.msra.mxu0 %v516
        %547 = vmatprep.subr.mxu0 0.0
        %548 = vmatpush1.msra.mxu0 %v515
        %549 = vmatprep.subr.mxu0 0.0
        %550 = vmatpush1.msra.mxu0 %v514
        %551 = vmatprep.subr.mxu0 0.0
        %552 = vmatpush1.msra.mxu0 %v513
        %553 = vmatprep.subr.mxu0 0.0
        %554 = vmatpush1.msra.mxu0 %v512
        %555 = vmatprep.subr.mxu0 0.0
        %556 = vmatpush1.msra.mxu0 %v511
        %557 = vmatprep.subr.mxu0 0.0
        %558 = vmatpush1.msra.mxu0 %v510
        %559 = vmatprep.subr.mxu0 0.0
        %560 = vmatpush1.msra.mxu0 %v509
        %561 = vmatprep.subr.mxu0 0.0
        %562 = vmatpush1.msra.mxu0 %v508
        %563 = vmatprep.subr.mxu0 0.0
        %564 = vmatpush1.msra.mxu0 %v507
        %565 = vmatprep.subr.mxu0 0.0
        %566 = vmatpush1.msra.mxu0 %v506
        %567 = vmatprep.subr.mxu0 0.0
        %568 = vmatpush1.msra.mxu0 %v505
        %569 = vmatprep.subr.mxu0 0.0
        %570 = vmatpush2.msra.mxu0 %v536
        %571 = vmatprep.subr.mxu0 0.0
        %572 = vmatpush2.msra.mxu0 %v535
        %573 = vmatprep.subr.mxu0 0.0
        %574 = vmatpush2.msra.mxu0 %v534
        %575 = vmatprep.subr.mxu0 0.0
        %576 = vmatpush2.msra.mxu0 %v533
        %577 = vmatprep.subr.mxu0 0.0
        %578 = vmatpush2.msra.mxu0 %v532
        %579 = vmatprep.subr.mxu0 0.0
        %580 = vmatpush2.msra.mxu0 %v531
        %581 = vmatprep.subr.mxu0 0.0
        %582 = vmatpush2.msra.mxu0 %v530
        %583 = vmatprep.subr.mxu0 0.0
        %584 = vmatpush2.msra.mxu0 %v529
        %585 = vmatprep.subr.mxu0 0.0
        %586 = vmatpush2.msra.mxu0 %v528
        %587 = vmatprep.subr.mxu0 0.0
        %588 = vmatpush2.msra.mxu0 %v527
        %589 = vmatprep.subr.mxu0 0.0
        %590 = vmatpush2.msra.mxu0 %v526
        %591 = vmatprep.subr.mxu0 0.0
        %592 = vmatpush2.msra.mxu0 %v525
        %593 = vmatprep.subr.mxu0 0.0
        %594 = vmatpush2.msra.mxu0 %v524
        %595 = vmatprep.subr.mxu0 0.0
        %596 = vmatpush2.msra.mxu0 %v523
        %597 = vmatprep.subr.mxu0 0.0
        %598 = vmatpush2.msra.mxu0 %v522
        %599 = vmatprep.subr.mxu0 0.0
        %600 = vmatpush2.msra.mxu0 %v521
        %601 = vmatprep.mubr.f32.mxu0 %v481
        %602 = vmatmul.mubr.f32.gmra.mxu0 %v457
        %v603 = vpop.f32.mrf.mxu0
        %v604 = vadd.f32 0.0, %v603
        %v605 = vpop.f32.mrf.mxu0
        %606 = vmatprep.mubr.f32.mxu0 %v482
        %607 = vmatmul.mubr.f32.gmra.mxu0 %v458
        %v608 = vpop.f32.mrf.mxu0
        %v609 = vadd.f32 0.0, %v608
        %v610 = vpop.f32.mrf.mxu0
        %611 = vmatprep.mubr.f32.mxu0 %v483
        %612 = vmatmul.mubr.f32.gmra.mxu0 %v459
        %v613 = vpop.f32.mrf.mxu0
        %v614 = vadd.f32 0.0, %v613
        %v615 = vpop.f32.mrf.mxu0
        %616 = vmatprep.mubr.f32.mxu0 %v484
        %617 = vmatmul.mubr.f32.gmra.mxu0 %v460
        %v618 = vpop.f32.mrf.mxu0
        %v619 = vadd.f32 0.0, %v618
        %v620 = vpop.f32.mrf.mxu0
        %621 = vmatprep.mubr.f32.mxu0 %v485
        %622 = vmatmul.mubr.f32.gmra.mxu0 %v461
        %v623 = vpop.f32.mrf.mxu0
        %v624 = vadd.f32 0.0, %v623
        %v625 = vpop.f32.mrf.mxu0
        %626 = vmatprep.mubr.f32.mxu0 %v486
        %627 = vmatmul.mubr.f32.gmra.mxu0 %v462
        %v628 = vpop.f32.mrf.mxu0
        %v629 = vadd.f32 0.0, %v628
        %v630 = vpop.f32.mrf.mxu0
        %631 = vmatprep.mubr.f32.mxu0 %v487
        %632 = vmatmul.mubr.f32.gmra.mxu0 %v463
        %v633 = vpop.f32.mrf.mxu0
        %v634 = vadd.f32 0.0, %v633
        %v635 = vpop.f32.mrf.mxu0
        %636 = vmatprep.mubr.f32.mxu0 %v488
        %637 = vmatmul.mubr.f32.gmra.mxu0 %v464
        %v638 = vpop.f32.mrf.mxu0
        %v639 = vadd.f32 0.0, %v638
        %v640 = vpop.f32.mrf.mxu0
        %641 = vmatprep.mubr.f32.mxu0 %v489
        %642 = vmatmul.mubr.f32.gmra.mxu0 %v465
        %v643 = vpop.f32.mrf.mxu0
        %v644 = vadd.f32 0.0, %v643
        %v645 = vpop.f32.mrf.mxu0
        %646 = vmatprep.mubr.f32.mxu0 %v490
        %647 = vmatmul.mubr.f32.gmra.mxu0 %v466
        %v648 = vpop.f32.mrf.mxu0
        %v649 = vadd.f32 0.0, %v648
        %v650 = vpop.f32.mrf.mxu0
        %651 = vmatprep.mubr.f32.mxu0 %v491
        %652 = vmatmul.mubr.f32.gmra.mxu0 %v467
        %v653 = vpop.f32.mrf.mxu0
        %v654 = vadd.f32 0.0, %v653
        %v655 = vpop.f32.mrf.mxu0
        %656 = vmatprep.mubr.f32.mxu0 %v492
        %657 = vmatmul.mubr.f32.gmra.mxu0 %v468
        %v658 = vpop.f32.mrf.mxu0
        %v659 = vadd.f32 0.0, %v658
        %v660 = vpop.f32.mrf.mxu0
        %661 = vmatprep.mubr.f32.mxu0 %v493
        %662 = vmatmul.mubr.f32.gmra.mxu0 %v469
        %v663 = vpop.f32.mrf.mxu0
        %v664 = vadd.f32 0.0, %v663
        %v665 = vpop.f32.mrf.mxu0
        %666 = vmatprep.mubr.f32.mxu0 %v494
        %667 = vmatmul.mubr.f32.gmra.mxu0 %v470
        %v668 = vpop.f32.mrf.mxu0
        %v669 = vadd.f32 0.0, %v668
        %v670 = vpop.f32.mrf.mxu0
        %671 = vmatprep.mubr.f32.mxu0 %v495
        %672 = vmatmul.mubr.f32.gmra.mxu0 %v471
        %v673 = vpop.f32.mrf.mxu0
        %v674 = vadd.f32 0.0, %v673
        %v675 = vpop.f32.mrf.mxu0
        %676 = vmatprep.mubr.f32.mxu0 %v496
        %677 = vmatmul.mubr.f32.gmra.mxu0 %v472
        %v678 = vpop.f32.mrf.mxu0
        %v679 = vadd.f32 0.0, %v678
        %v680 = vpop.f32.mrf.mxu0
        %681 = vmatprep.mubr.f32.mxu0 %v497
        %682 = vmatmul.mubr.f32.gmra.mxu0 %v473
        %v683 = vpop.f32.mrf.mxu0
        %v684 = vadd.f32 0.0, %v683
        %v685 = vpop.f32.mrf.mxu0
        %686 = vmatprep.mubr.f32.mxu0 %v498
        %687 = vmatmul.mubr.f32.gmra.mxu0 %v474
        %v688 = vpop.f32.mrf.mxu0
        %v689 = vadd.f32 0.0, %v688
        %v690 = vpop.f32.mrf.mxu0
        %691 = vmatprep.mubr.f32.mxu0 %v499
        %692 = vmatmul.mubr.f32.gmra.mxu0 %v475
        %v693 = vpop.f32.mrf.mxu0
        %v694 = vadd.f32 0.0, %v693
        %v695 = vpop.f32.mrf.mxu0
        %696 = vmatprep.mubr.f32.mxu0 %v500
        %697 = vmatmul.mubr.f32.gmra.mxu0 %v476
        %v698 = vpop.f32.mrf.mxu0
        %v699 = vadd.f32 0.0, %v698
        %v700 = vpop.f32.mrf.mxu0
        %701 = vmatprep.mubr.f32.mxu0 %v501
        %702 = vmatmul.mubr.f32.gmra.mxu0 %v477
        %v703 = vpop.f32.mrf.mxu0
        %v704 = vadd.f32 0.0, %v703
        %v705 = vpop.f32.mrf.mxu0
        %706 = vmatprep.mubr.f32.mxu0 %v502
        %707 = vmatmul.mubr.f32.gmra.mxu0 %v478
        %v708 = vpop.f32.mrf.mxu0
        %v709 = vadd.f32 0.0, %v708
        %v710 = vpop.f32.mrf.mxu0
        %711 = vmatprep.mubr.f32.mxu0 %v503
        %712 = vmatmul.mubr.f32.gmra.mxu0 %v479
        %v713 = vpop.f32.mrf.mxu0
        %v714 = vadd.f32 0.0, %v713
        %v715 = vpop.f32.mrf.mxu0
        %716 = vmatprep.mubr.f32.mxu0 %v504
        %717 = vmatmul.mubr.f32.gmra.mxu0 %v480
        %v718 = vpop.f32.mrf.mxu0
        %v719 = vadd.f32 0.0, %v718
        %v720 = vpop.f32.mrf.mxu0
        %721 = vdwg.mxu0
        %722 = vmatprep.subr.mxu0 0.0
        %723 = vmatpush1.msra.mxu0 %v439
        %724 = vmatprep.subr.mxu0 0.0
        %725 = vmatpush1.msra.mxu0 %v438
        %726 = vmatprep.subr.mxu0 0.0
        %727 = vmatpush1.msra.mxu0 %v437
        %728 = vmatprep.subr.mxu0 0.0
        %729 = vmatpush1.msra.mxu0 %v436
        %730 = vmatprep.subr.mxu0 0.0
        %731 = vmatpush1.msra.mxu0 %v435
        %732 = vmatprep.subr.mxu0 0.0
        %733 = vmatpush1.msra.mxu0 %v434
        %734 = vmatprep.subr.mxu0 0.0
        %735 = vmatpush1.msra.mxu0 %v433
        %736 = vmatprep.subr.mxu0 0.0
        %737 = vmatpush1.msra.mxu0 %v432
        %738 = vmatprep.subr.mxu0 0.0
        %739 = vmatpush1.msra.mxu0 %v431
        %740 = vmatprep.subr.mxu0 0.0
        %741 = vmatpush1.msra.mxu0 %v430
        %742 = vmatprep.subr.mxu0 0.0
        %743 = vmatpush1.msra.mxu0 %v429
        %744 = vmatprep.subr.mxu0 0.0
        %745 = vmatpush1.msra.mxu0 %v428
        %746 = vmatprep.subr.mxu0 0.0
        %747 = vmatpush1.msra.mxu0 %v427
        %748 = vmatprep.subr.mxu0 0.0
        %749 = vmatpush1.msra.mxu0 %v426
        %750 = vmatprep.subr.mxu0 0.0
        %751 = vmatpush1.msra.mxu0 %v425
        %752 = vmatprep.subr.mxu0 0.0
        %753 = vmatpush1.msra.mxu0 %v424
        %754 = vmatprep.subr.mxu0 0.0
        %755 = vmatpush2.msra.mxu0 %v455
        %756 = vmatprep.subr.mxu0 0.0
        %757 = vmatpush2.msra.mxu0 %v454
        %758 = vmatprep.subr.mxu0 0.0
        %759 = vmatpush2.msra.mxu0 %v453
        %760 = vmatprep.subr.mxu0 0.0
        %761 = vmatpush2.msra.mxu0 %v452
        %762 = vmatprep.subr.mxu0 0.0
        %763 = vmatpush2.msra.mxu0 %v451
        %764 = vmatprep.subr.mxu0 0.0
        %765 = vmatpush2.msra.mxu0 %v450
        %766 = vmatprep.subr.mxu0 0.0
        %767 = vmatpush2.msra.mxu0 %v449
        %768 = vmatprep.subr.mxu0 0.0
        %769 = vmatpush2.msra.mxu0 %v448
        %770 = vmatprep.subr.mxu0 0.0
        %771 = vmatpush2.msra.mxu0 %v447
        %772 = vmatprep.subr.mxu0 0.0
        %773 = vmatpush2.msra.mxu0 %v446
        %774 = vmatprep.subr.mxu0 0.0
        %775 = vmatpush2.msra.mxu0 %v445
        %776 = vmatprep.subr.mxu0 0.0
        %777 = vmatpush2.msra.mxu0 %v444
        %778 = vmatprep.subr.mxu0 0.0
        %779 = vmatpush2.msra.mxu0 %v443
        %780 = vmatprep.subr.mxu0 0.0
        %781 = vmatpush2.msra.mxu0 %v442
        %782 = vmatprep.subr.mxu0 0.0
        %783 = vmatpush2.msra.mxu0 %v441
        %784 = vmatprep.subr.mxu0 0.0
        %785 = vmatpush2.msra.mxu0 %v440
        %786 = vmatprep.mubr.f32.mxu0 %v400
        %787 = vmatmul.mubr.f32.gmra.mxu0 %v376
        %v788 = vpop.f32.mrf.mxu0
        %v789 = vadd.f32 %v604, %v788
        %v790 = vpop.f32.mrf.mxu0
        %791 = vmatprep.mubr.f32.mxu0 %v401
        %792 = vmatmul.mubr.f32.gmra.mxu0 %v377
        %v793 = vpop.f32.mrf.mxu0
        %v794 = vadd.f32 %v609, %v793
        %v795 = vpop.f32.mrf.mxu0
        %796 = vmatprep.mubr.f32.mxu0 %v402
        %797 = vmatmul.mubr.f32.gmra.mxu0 %v378
        %v798 = vpop.f32.mrf.mxu0
        %v799 = vadd.f32 %v614, %v798
        %v800 = vpop.f32.mrf.mxu0
        %801 = vmatprep.mubr.f32.mxu0 %v403
        %802 = vmatmul.mubr.f32.gmra.mxu0 %v379
        %v803 = vpop.f32.mrf.mxu0
        %v804 = vadd.f32 %v619, %v803
        %v805 = vpop.f32.mrf.mxu0
        %806 = vmatprep.mubr.f32.mxu0 %v404
        %807 = vmatmul.mubr.f32.gmra.mxu0 %v380
        %v808 = vpop.f32.mrf.mxu0
        %v809 = vadd.f32 %v624, %v808
        %v810 = vpop.f32.mrf.mxu0
        %811 = vmatprep.mubr.f32.mxu0 %v405
        %812 = vmatmul.mubr.f32.gmra.mxu0 %v381
        %v813 = vpop.f32.mrf.mxu0
        %v814 = vadd.f32 %v629, %v813
        %v815 = vpop.f32.mrf.mxu0
        %816 = vmatprep.mubr.f32.mxu0 %v406
        %817 = vmatmul.mubr.f32.gmra.mxu0 %v382
        %v818 = vpop.f32.mrf.mxu0
        %v819 = vadd.f32 %v634, %v818
        %v820 = vpop.f32.mrf.mxu0
        %821 = vmatprep.mubr.f32.mxu0 %v407
        %822 = vmatmul.mubr.f32.gmra.mxu0 %v383
        %v823 = vpop.f32.mrf.mxu0
        %v824 = vadd.f32 %v639, %v823
        %v825 = vpop.f32.mrf.mxu0
        %826 = vmatprep.mubr.f32.mxu0 %v408
        %827 = vmatmul.mubr.f32.gmra.mxu0 %v384
        %v828 = vpop.f32.mrf.mxu0
        %v829 = vadd.f32 %v644, %v828
        %v830 = vpop.f32.mrf.mxu0
        %831 = vmatprep.mubr.f32.mxu0 %v409
        %832 = vmatmul.mubr.f32.gmra.mxu0 %v385
        %v833 = vpop.f32.mrf.mxu0
        %v834 = vadd.f32 %v649, %v833
        %v835 = vpop.f32.mrf.mxu0
        %836 = vmatprep.mubr.f32.mxu0 %v410
        %837 = vmatmul.mubr.f32.gmra.mxu0 %v386
        %v838 = vpop.f32.mrf.mxu0
        %v839 = vadd.f32 %v654, %v838
        %v840 = vpop.f32.mrf.mxu0
        %841 = vmatprep.mubr.f32.mxu0 %v411
        %842 = vmatmul.mubr.f32.gmra.mxu0 %v387
        %v843 = vpop.f32.mrf.mxu0
        %v844 = vadd.f32 %v659, %v843
        %v845 = vpop.f32.mrf.mxu0
        %846 = vmatprep.mubr.f32.mxu0 %v412
        %847 = vmatmul.mubr.f32.gmra.mxu0 %v388
        %v848 = vpop.f32.mrf.mxu0
        %v849 = vadd.f32 %v664, %v848
        %v850 = vpop.f32.mrf.mxu0
        %851 = vmatprep.mubr.f32.mxu0 %v413
        %852 = vmatmul.mubr.f32.gmra.mxu0 %v389
        %v853 = vpop.f32.mrf.mxu0
        %v854 = vadd.f32 %v669, %v853
        %v855 = vpop.f32.mrf.mxu0
        %856 = vmatprep.mubr.f32.mxu0 %v414
        %857 = vmatmul.mubr.f32.gmra.mxu0 %v390
        %v858 = vpop.f32.mrf.mxu0
        %v859 = vadd.f32 %v674, %v858
        %v860 = vpop.f32.mrf.mxu0
        %861 = vmatprep.mubr.f32.mxu0 %v415
        %862 = vmatmul.mubr.f32.gmra.mxu0 %v391
        %v863 = vpop.f32.mrf.mxu0
        %v864 = vadd.f32 %v679, %v863
        %v865 = vpop.f32.mrf.mxu0
        %866 = vmatprep.mubr.f32.mxu0 %v416
        %867 = vmatmul.mubr.f32.gmra.mxu0 %v392
        %v868 = vpop.f32.mrf.mxu0
        %v869 = vadd.f32 %v684, %v868
        %v870 = vpop.f32.mrf.mxu0
        %871 = vmatprep.mubr.f32.mxu0 %v417
        %872 = vmatmul.mubr.f32.gmra.mxu0 %v393
        %v873 = vpop.f32.mrf.mxu0
        %v874 = vadd.f32 %v689, %v873
        %v875 = vpop.f32.mrf.mxu0
        %876 = vmatprep.mubr.f32.mxu0 %v418
        %877 = vmatmul.mubr.f32.gmra.mxu0 %v394
        %v878 = vpop.f32.mrf.mxu0
        %v879 = vadd.f32 %v694, %v878
        %v880 = vpop.f32.mrf.mxu0
        %881 = vmatprep.mubr.f32.mxu0 %v419
        %882 = vmatmul.mubr.f32.gmra.mxu0 %v395
        %v883 = vpop.f32.mrf.mxu0
        %v884 = vadd.f32 %v699, %v883
        %v885 = vpop.f32.mrf.mxu0
        %886 = vmatprep.mubr.f32.mxu0 %v420
        %887 = vmatmul.mubr.f32.gmra.mxu0 %v396
        %v888 = vpop.f32.mrf.mxu0
        %v889 = vadd.f32 %v704, %v888
        %v890 = vpop.f32.mrf.mxu0
        %891 = vmatprep.mubr.f32.mxu0 %v421
        %892 = vmatmul.mubr.f32.gmra.mxu0 %v397
        %v893 = vpop.f32.mrf.mxu0
        %v894 = vadd.f32 %v709, %v893
        %v895 = vpop.f32.mrf.mxu0
        %896 = vmatprep.mubr.f32.mxu0 %v422
        %897 = vmatmul.mubr.f32.gmra.mxu0 %v398
        %v898 = vpop.f32.mrf.mxu0
        %v899 = vadd.f32 %v714, %v898
        %v900 = vpop.f32.mrf.mxu0
        %901 = vmatprep.mubr.f32.mxu0 %v423
        %902 = vmatmul.mubr.f32.gmra.mxu0 %v399
        %v903 = vpop.f32.mrf.mxu0
        %v904 = vadd.f32 %v719, %v903
        %v905 = vpop.f32.mrf.mxu0
        %906 = vdwg.mxu0
        %v907 = vld [vmem:[%s3] sm:$0x1]
        %v909 = vlaneseq
        %v910 = vshrl.u32 %v909, 7
        %v911 = vsub.s32 0, %v910
        %v912 = vrot.slane %v907, %v911
        %v914 = vadd.f32 %v789, %v912
        %v915 = vadd.f32 %v794, %v912
        %v916 = vadd.f32 %v799, %v912
        %v917 = vadd.f32 %v804, %v912
        %v918 = vadd.f32 %v809, %v912
        %v919 = vadd.f32 %v814, %v912
        %v920 = vadd.f32 %v819, %v912
        %v921 = vadd.f32 %v824, %v912
        %v922 = vadd.f32 %v829, %v912
        %v923 = vadd.f32 %v834, %v912
        %v924 = vadd.f32 %v839, %v912
        %v925 = vadd.f32 %v844, %v912
        %v926 = vadd.f32 %v849, %v912
        %v927 = vadd.f32 %v854, %v912
        %v928 = vadd.f32 %v859, %v912
        %v929 = vadd.f32 %v864, %v912
        %v930 = vadd.f32 %v869, %v912
        %v931 = vadd.f32 %v874, %v912
        %v932 = vadd.f32 %v879, %v912
        %v933 = vadd.f32 %v884, %v912
        %v934 = vadd.f32 %v889, %v912
        %v935 = vadd.f32 %v894, %v912
        %v936 = vadd.f32 %v899, %v912
        %v937 = vadd.f32 %v904, %v912
        %v938 = vmax.f32 %v914, 0.0
        %v939 = vmax.f32 %v915, 0.0
        %v940 = vmax.f32 %v916, 0.0
        %v941 = vmax.f32 %v917, 0.0
        %v942 = vmax.f32 %v918, 0.0
        %v943 = vmax.f32 %v919, 0.0
        %v944 = vmax.f32 %v920, 0.0
        %v945 = vmax.f32 %v921, 0.0
        %v946 = vmax.f32 %v922, 0.0
        %v947 = vmax.f32 %v923, 0.0
        %v948 = vmax.f32 %v924, 0.0
        %v949 = vmax.f32 %v925, 0.0
        %v950 = vmax.f32 %v926, 0.0
        %v951 = vmax.f32 %v927, 0.0
        %v952 = vmax.f32 %v928, 0.0
        %v953 = vmax.f32 %v929, 0.0
        %v954 = vmax.f32 %v930, 0.0
        %v955 = vmax.f32 %v931, 0.0
        %v956 = vmax.f32 %v932, 0.0
        %v957 = vmax.f32 %v933, 0.0
        %v958 = vmax.f32 %v934, 0.0
        %v959 = vmax.f32 %v935, 0.0
        %v960 = vmax.f32 %v936, 0.0
        %v961 = vmax.f32 %v937, 0.0
        %962 = vst [vmem:[%s267] sm:$0xff] %v938
        %963 = vst [vmem:[%s267 + $0x8] sm:$0xff] %v939
        %964 = vst [vmem:[%s267 + $0x10] sm:$0xff] %v940
        %965 = vst [vmem:[%s267 + $0x18] sm:$0xff] %v941
        %966 = vst [vmem:[%s267 + $0x20] sm:$0xff] %v942
        %967 = vst [vmem:[%s267 + $0x28] sm:$0xff] %v943
        %968 = vst [vmem:[%s267 + $0x30] sm:$0xff] %v944
        %969 = vst [vmem:[%s267 + $0x38] sm:$0xff] %v945
        %970 = vst [vmem:[%s267 + $0x40] sm:$0xff] %v946
        %971 = vst [vmem:[%s267 + $0x48] sm:$0xff] %v947
        %972 = vst [vmem:[%s267 + $0x50] sm:$0xff] %v948
        %973 = vst [vmem:[%s267 + $0x58] sm:$0xff] %v949
        %974 = vst [vmem:[%s267 + $0x60] sm:$0xff] %v950
        %975 = vst [vmem:[%s267 + $0x68] sm:$0xff] %v951
        %976 = vst [vmem:[%s267 + $0x70] sm:$0xff] %v952
        %977 = vst [vmem:[%s267 + $0x78] sm:$0xff] %v953
        %978 = vst [vmem:[%s267 + $0x80] sm:$0xff] %v954
        %979 = vst [vmem:[%s267 + $0x88] sm:$0xff] %v955
        %980 = vst [vmem:[%s267 + $0x90] sm:$0xff] %v956
        %981 = vst [vmem:[%s267 + $0x98] sm:$0xff] %v957
        %982 = vst [vmem:[%s267 + $0xa0] sm:$0xff] %v958
        %983 = vst [vmem:[%s267 + $0xa8] sm:$0xff] %v959
        %984 = vst [vmem:[%s267 + $0xb0] sm:$0xff] %v960
        %985 = vst [vmem:[%s267 + $0xb8] sm:$0xff] %v961
        %s986 = sand.u32 %s142, 1
        %s987 = scalar_lea.sflag [#allocation4], %s986
        %s988 = sand.u32 %s142, 1
        %s989 = smul.addr %s988, 192
        %s990 = scalar_lea.vmem [#allocation3], %s989
        // Predicated region
        $region37: #{tpu_custom_call.1} parent=35 // pred_check
          %p991 = pneg %p152
        $region38: #{tpu_custom_call.1} parent=35 // pred_check_branch
          %993 = sbr.rel (%p991) target = $region40
        $region39: #{tpu_custom_call.1} parent=35 // pred_region
          %s994 = smul.u32 8, %s23
          %s996 = ssub.s32 3072, 3072
          %997 = vsyncadd %s987, %s996
          %s998 = smul.addr %s994, 3
          %s999 = smul.addr %s22, 72
          %s1000 = sadd.s32 %s998, %s999
          %s1001 = smul.addr %s1000, 128
          %s1002 = scalar_lea.hbm %s4, %s1001
          %s1003 = sshll.u32 %s990, 4
          %s1004 = int_to_ptr.vmem [resolvable:$true] %s1003
          %1009 = dma.vmem_to_hbm [thread:$0]  %s1004, 3072, %s1002, %s987, 128, 128, 8
        $region40: #{tpu_custom_call.1} parent=35 // pred_fallthru
          _
      $region36: #{tpu_custom_call.1} parent=5 // pred_fallthru
        _
      %p1010 = scmp.le.s32.totalorder 2, %s13
      // Predicated region
      $region41: #{tpu_custom_call.1} parent=5 // pred_check
        %p1011 = pneg %p1010
      $region42: #{tpu_custom_call.1} parent=5 // pred_check_branch
        %1013 = sbr.rel (%p1011) target = $region44
      $region43: #{tpu_custom_call.1} parent=5 // pred_region
        %s1014 = ssub.s32 %s13, 2
        // Predicated region
        $region45: #{tpu_custom_call.1} parent=43 // pred_check
          %p1015 = pneg %p158
        $region46: #{tpu_custom_call.1} parent=43 // pred_check_branch
          %1017 = sbr.rel (%p1015) target = $region48
        $region47: #{tpu_custom_call.1} parent=43 // pred_region
          %s1018 = sand.u32 %s143, 1
          %s1019 = scalar_lea.sflag [#allocation4], %s1018
          %s1020 = sand.u32 %s143, 1
          %s1021 = smul.addr %s1020, 192
          %s1022 = scalar_lea.vmem [#allocation3], %s1021
          %1023 = dma.done %s1019, 3072
        $region48: #{tpu_custom_call.1} parent=43 // pred_fallthru
          _
      $region44: #{tpu_custom_call.1} parent=5 // pred_fallthru
        _
    $region6: #{tpu_custom_call.1} parent=1 // loop_footer
      %s17 = sadd.s32 1, %s13
    $region7: #{tpu_custom_call.1} parent=1 // loop_footer_branch
      %12 = sbr.rel target = $region3
    $region8: #{tpu_custom_call.1} parent=1 // loop_exit
      _
    %1024 = vsyncpa [#allocation4], 1
    %s1025 = scalar_lea.sflag [#allocation4], 1
    %1026 = vsyncpa %s1025, 1

</llo_original>
